<compile_context>
chip_gen: v6e
topology: v6e:2x2x1
jax: 0.10.0
libtpu: 0.0.40
codegen_flags: <defaults>
</compile_context>

<pallas_src>
import jax
import jax.numpy as jnp
from jax.experimental import pallas as pl
from jax.experimental.pallas import tpu as pltpu


def _fused_pointwise_conv_kernel(x_ref, w1_ref, b1_ref, w2_ref, b2_ref, o_ref):
    # x_ref:  (1, Cin, tile_t)   -- time is the lane (last) dim
    # w1_ref: (Cexp, Cin), b1_ref: (Cexp, 1) f32
    # w2_ref: (Cout, Cexp), b2_ref: (Cout, 1) f32
    # o_ref:  (1, Cout, tile_t)
    x = x_ref[0]                                                    # (Cin, tile_t)
    h = jnp.dot(w1_ref[...], x, preferred_element_type=jnp.float32)
    h = jnp.maximum(h + b1_ref[...], 0.0)                           # ReLU, f32 math
    # Cast the intermediate to the I/O dtype before the 2nd matmul: with bf16
    # I/O this halves rhs-vreg pushes on the MXU; with f32 I/O it is a no-op.
    h = h.astype(w2_ref.dtype)
    y = jnp.dot(w2_ref[...], h, preferred_element_type=jnp.float32) + b2_ref[...]
    o_ref[0] = y.astype(o_ref.dtype)


def _pick_tile_t(T, N, max_tile_t, min_grid_steps):
    """Largest lane-aligned time tile <= max_tile_t, with >= min_grid_steps total steps."""
    if T <= 128:
        return T  # cannot split below one lane group; block must equal full dim
    tile = min(max_tile_t, T)
    if tile < T:
        tile = max((tile // 128) * 128, 128)      # partial tiles must be 128-multiples
    # Shrink until the total grid has enough steps (v7x megacore + pipelining).
    while N * pl.cdiv(T, tile) < min_grid_steps and tile > 128:
        tile = max(((tile // 2) // 128) * 128, 128)
    # Prefer a 128-multiple divisor of T near `tile` to avoid masked edge blocks;
    # otherwise keep `tile` (masked edge is safe: op is pointwise along time).
    if tile < T and T % tile != 0:
        for cand in range(tile, max(tile // 2, 127), -128):
            if T % cand == 0:
                return cand
    return tile


def test_model_1_forward(x_nct, w1, b1, w2, b2, *,
                         max_tile_t=65536, min_grid_steps=2):
    """x_nct: (N, Cin, T)   w1: (Cexp, Cin, 1)  b1: (Cexp,)  w2: (Cout, Cexp, 1)  b2: (Cout,)

    Output dtype follows x_nct.dtype: pass bf16 x for half the HBM traffic
    (math / accumulation stay f32); pass f32 x for exact PyTorch semantics.
    """
    N, Cin, T = x_nct.shape
    Cexp = w1.shape[0]
    Cout = w2.shape[0]
    io_dtype = x_nct.dtype

    # Conv1d(k=1) weights -> plain channel-mixing matrices (no layout passes on x).
    w1_m = w1[:, :, 0].astype(io_dtype)            # (Cexp, Cin)
    w2_m = w2[:, :, 0].astype(io_dtype)            # (Cout, Cexp)
    b1_c = b1.reshape(Cexp, 1).astype(jnp.float32)  # biases stay f32 (tiny)
    b2_c = b2.reshape(Cout, 1).astype(jnp.float32)

    tile_t = _pick_tile_t(T, N, max_tile_t, min_grid_steps)
    grid = (N, pl.cdiv(T, tile_t))

    # VMEM budget: double-buffered x/out blocks + f32 intermediate (+ cast copy).
    io_bytes = jnp.dtype(io_dtype).itemsize
    x_blk = max(Cin, 8) * tile_t * io_bytes
    o_blk = max(Cout, 8) * tile_t * io_bytes
    h_blk = max(Cexp, 8) * tile_t * (4 + io_bytes)
    est = 2 * (x_blk + o_blk) + h_blk + (2 << 20)
    vmem_limit = int(min(max(est * 3 // 2, 32 << 20), 48 << 20))

    cost = pl.CostEstimate(
        flops=2 * N * T * (Cin * Cexp + Cexp * Cout),
        transcendentals=0,
        bytes_accessed=(N * T * (Cin + Cout) + Cexp * Cin + Cout * Cexp) * io_bytes
                       + (Cexp + Cout) * 4,
    )

    return pl.pallas_call(
        _fused_pointwise_conv_kernel,
        out_shape=jax.ShapeDtypeStruct((N, Cout, T), io_dtype),
        grid_spec=pltpu.PrefetchScalarGridSpec(
            num_scalar_prefetch=0,
            grid=grid,
            in_specs=[
                pl.BlockSpec((1, Cin, tile_t), lambda n, t: (n, 0, t)),
                pl.BlockSpec((Cexp, Cin), lambda n, t: (0, 0)),
                pl.BlockSpec((Cexp, 1), lambda n, t: (0, 0)),
                pl.BlockSpec((Cout, Cexp), lambda n, t: (0, 0)),
                pl.BlockSpec((Cout, 1), lambda n, t: (0, 0)),
            ],
            out_specs=pl.BlockSpec((1, Cout, tile_t), lambda n, t: (n, 0, t)),
        ),
        compiler_params=pltpu.CompilerParams(
            dimension_semantics=("parallel", "parallel"),
            vmem_limit_bytes=vmem_limit),
        cost_estimate=cost,
    )(x_nct, w1_m, b1_c, w2_m, b2_c)


if __name__ == "__main__":
    # Small shapes consistent with the module: batch=2, in=4, expand=32, out=8, seq=16
    N, Cin, Cexp, Cout, T = 2, 4, 32, 8, 16

    key = jax.random.PRNGKey(0)
    kx, kw1, kb1, kw2, kb2 = jax.random.split(key, 5)

    x = jax.random.normal(kx, (N, Cin, T), dtype=jnp.float32)
    # Deterministic synthetic parameters (shapes match nn.Conv1d(C_in, C_out, 1))
    w1 = jax.random.normal(kw1, (Cexp, Cin, 1), dtype=jnp.float32) * 0.1
    b1 = jax.random.normal(kb1, (Cexp,), dtype=jnp.float32) * 0.1
    w2 = jax.random.normal(kw2, (Cout, Cexp, 1), dtype=jnp.float32) * 0.1
    b2 = jax.random.normal(kb2, (Cout,), dtype=jnp.float32) * 0.1

    # Pure-JAX reference of the PyTorch forward (Conv1d k=1 -> ReLU -> Conv1d k=1)
    h_ref = jnp.einsum("oi,nit->not", w1[:, :, 0], x) + b1[None, :, None]
    h_ref = jnp.maximum(h_ref, 0.0)
    y_ref = jnp.einsum("oi,nit->not", w2[:, :, 0], h_ref) + b2[None, :, None]

    # f32 I/O path: exact PyTorch semantics.
    out_f32 = jax.block_until_ready(test_model_1_forward(x, w1, b1, w2, b2))
    assert out_f32.shape == (N, Cout, T), out_f32.shape
    assert out_f32.dtype == jnp.float32
    assert jnp.allclose(out_f32, y_ref, atol=1e-5, rtol=1e-5)

    # bf16 I/O path: halves HBM traffic (review item), f32 accumulation inside.
    out_bf16 = jax.block_until_ready(
        test_model_1_forward(x.astype(jnp.bfloat16), w1, b1, w2, b2))
    assert out_bf16.shape == (N, Cout, T), out_bf16.shape
    assert out_bf16.dtype == jnp.bfloat16
    assert jnp.allclose(out_bf16.astype(jnp.float32), y_ref, atol=5e-2, rtol=5e-2)

    print("KERNEL_OK")
</pallas_src>

<mosaic_0001>
module attributes {stable_mosaic.version = 11 : i64} {
  func.func @_fused_pointwise_conv_kernel(%arg0: i32, %arg1: i32, %arg2: memref<1x4x16xf32, #tpu.memory_space<vmem>>, %arg3: memref<32x4xf32, #tpu.memory_space<vmem>>, %arg4: memref<32x1xf32, #tpu.memory_space<vmem>>, %arg5: memref<8x32xf32, #tpu.memory_space<vmem>>, %arg6: memref<8x1xf32, #tpu.memory_space<vmem>>, %arg7: memref<1x8x16xf32, #tpu.memory_space<vmem>>) attributes {dimension_semantics = [#tpu.dimension_semantics<parallel>, #tpu.dimension_semantics<parallel>], iteration_bounds = array<i64: 2, 1>, scalar_prefetch = 0 : i64, scratch_operands = 0 : i64, tpu.core_type = #tpu.core_type<tc>, window_params = [{transform_indices = @transform_0, window_bounds = array<i64: 1, 4, 16>}, {pipeline_mode = #tpu.pipeline_mode<synchronous>, transform_indices = @transform_1, window_bounds = array<i64: 32, 4>}, {pipeline_mode = #tpu.pipeline_mode<synchronous>, transform_indices = @transform_2, window_bounds = array<i64: 32, 1>}, {pipeline_mode = #tpu.pipeline_mode<synchronous>, transform_indices = @transform_3, window_bounds = array<i64: 8, 32>}, {pipeline_mode = #tpu.pipeline_mode<synchronous>, transform_indices = @transform_4, window_bounds = array<i64: 8, 1>}, {transform_indices = @transform_5, window_bounds = array<i64: 1, 8, 16>}]} {
    %c0 = arith.constant 0 : index
    %c0_0 = arith.constant 0 : index
    %c0_1 = arith.constant 0 : index
    %0 = vector.load %arg2[%c0, %c0_0, %c0_1] : memref<1x4x16xf32, #tpu.memory_space<vmem>>, vector<1x4x16xf32>
    %1 = vector.shape_cast %0 : vector<1x4x16xf32> to vector<4x16xf32>
    %c0_2 = arith.constant 0 : index
    %c0_3 = arith.constant 0 : index
    %2 = vector.load %arg3[%c0_2, %c0_3] : memref<32x4xf32, #tpu.memory_space<vmem>>, vector<32x4xf32>
    %cst = arith.constant dense<0.000000e+00> : vector<32x16xf32>
    %3 = tpu.matmul %2, %1, %cst {dimension_numbers = #tpu.dot_dimension_numbers<[1], [0], [0], [1], [0, 0, 1, 1], [], []>} : vector<32x4xf32>, vector<4x16xf32>, vector<32x16xf32> -> vector<32x16xf32>
    %c0_4 = arith.constant 0 : index
    %c0_5 = arith.constant 0 : index
    %4 = vector.load %arg4[%c0_4, %c0_5] : memref<32x1xf32, #tpu.memory_space<vmem>>, vector<32x1xf32>
    %5 = vector.broadcast %4 : vector<32x1xf32> to vector<32x16xf32>
    %6 = arith.addf %3, %5 : vector<32x16xf32>
    %cst_6 = arith.constant 0.000000e+00 : f32
    %7 = vector.broadcast %cst_6 : f32 to vector<32x16xf32>
    %8 = arith.maximumf %6, %7 : vector<32x16xf32>
    %c0_7 = arith.constant 0 : index
    %c0_8 = arith.constant 0 : index
    %9 = vector.load %arg5[%c0_7, %c0_8] : memref<8x32xf32, #tpu.memory_space<vmem>>, vector<8x32xf32>
    %cst_9 = arith.constant dense<0.000000e+00> : vector<8x16xf32>
    %10 = tpu.matmul %9, %8, %cst_9 {dimension_numbers = #tpu.dot_dimension_numbers<[1], [0], [0], [1], [0, 0, 1, 1], [], []>} : vector<8x32xf32>, vector<32x16xf32>, vector<8x16xf32> -> vector<8x16xf32>
    %c0_10 = arith.constant 0 : index
    %c0_11 = arith.constant 0 : index
    %11 = vector.load %arg6[%c0_10, %c0_11] : memref<8x1xf32, #tpu.memory_space<vmem>>, vector<8x1xf32>
    %12 = vector.broadcast %11 : vector<8x1xf32> to vector<8x16xf32>
    %13 = arith.addf %10, %12 : vector<8x16xf32>
    %c0_12 = arith.constant 0 : index
    %c0_13 = arith.constant 0 : index
    %c0_14 = arith.constant 0 : index
    %14 = vector.load %arg7[%c0_12, %c0_13, %c0_14] : memref<1x8x16xf32, #tpu.memory_space<vmem>>, vector<1x8x16xf32>
    %15 = vector.shape_cast %14 : vector<1x8x16xf32> to vector<8x16xf32>
    %16 = vector.shape_cast %13 : vector<8x16xf32> to vector<1x8x16xf32>
    tpu.vector_store %arg7[%c0_12, %c0_13, %c0_14], %16 {strides = array<i32>} : memref<1x8x16xf32, #tpu.memory_space<vmem>>, vector<1x8x16xf32>,
    return
  }
  func.func @transform_0(%arg0: i32, %arg1: i32) -> (i32, i32, i32) {
    %c0_i32 = arith.constant 0 : i32
    %c0_i32_0 = arith.constant 0 : i32
    return %arg0, %c0_i32, %arg1 : i32, i32, i32
  }
  func.func @transform_1(%arg0: i32, %arg1: i32) -> (i32, i32) {
    %c0_i32 = arith.constant 0 : i32
    %c0_i32_0 = arith.constant 0 : i32
    %c0_i32_1 = arith.constant 0 : i32
    return %c0_i32, %c0_i32_0 : i32, i32
  }
  func.func @transform_2(%arg0: i32, %arg1: i32) -> (i32, i32) {
    %c0_i32 = arith.constant 0 : i32
    %c0_i32_0 = arith.constant 0 : i32
    %c0_i32_1 = arith.constant 0 : i32
    return %c0_i32, %c0_i32_0 : i32, i32
  }
  func.func @transform_3(%arg0: i32, %arg1: i32) -> (i32, i32) {
    %c0_i32 = arith.constant 0 : i32
    %c0_i32_0 = arith.constant 0 : i32
    %c0_i32_1 = arith.constant 0 : i32
    return %c0_i32, %c0_i32_0 : i32, i32
  }
  func.func @transform_4(%arg0: i32, %arg1: i32) -> (i32, i32) {
    %c0_i32 = arith.constant 0 : i32
    %c0_i32_0 = arith.constant 0 : i32
    %c0_i32_1 = arith.constant 0 : i32
    return %c0_i32, %c0_i32_0 : i32, i32
  }
  func.func @transform_5(%arg0: i32, %arg1: i32) -> (i32, i32, i32) {
    %c0_i32 = arith.constant 0 : i32
    %c0_i32_0 = arith.constant 0 : i32
    return %arg0, %c0_i32, %arg1 : i32, i32, i32
  }
}

</mosaic_0001>

<llo_original>
// kernel: tpu_custom_call.1
$region0: #{tpu_custom_call.1}
  #allocation0 [shape = 'u32[]', space=smem, size = 0x4, offset = 0x4, fixed_abs, tag = 'smem constant byte address 0x4 - core index']
  #allocation1 [shape = 'u32[144,128]{1,0:T(1,128)}', space=vmem, size = 0x12000, scoped, tag = 'internal scratch']
  %s0 = inlined_call_operand.vmem [shape: f32[2,4,16], index: 0, kind: input, shape index: {}]
  %s1 = inlined_call_operand.vmem [shape: f32[32,4], index: 1, kind: input, shape index: {}]
  %s2 = inlined_call_operand.vmem [shape: f32[32,1], index: 2, kind: input, shape index: {}]
  %s3 = inlined_call_operand.vmem [shape: f32[8,32], index: 3, kind: input, shape index: {}]
  %s4 = inlined_call_operand.vmem [shape: f32[8,1], index: 4, kind: input, shape index: {}]
  %s5 = inlined_call_operand.hbm [shape: f32[2,8,16], index: 5, kind: output, shape index: {}]
  %s6 = sld [smem:[#allocation0]]
  $region53: #{tpu_custom_call.1} parent=0
    _
  %s8 = ssub.s32 1, %s6
  %s9 = scalar_select 0, %s8, %s6
  $region1: #{tpu_custom_call.1} parent=0
    #allocation2 [shape = 'u8[8192]{0}', space=vmem, size = 0x2000, scoped, tag = 'output window, operand 0']
    #allocation3 [shape = 's32[2]{0}', space=sflag, size = 0x8, scoped, tag = 'scoped memory for tpu_custom_call.1']
    %10 = vsyncpa [#allocation3], 0
    %s11 = scalar_lea.sflag [#allocation3], 1
    %12 = vsyncpa %s11, 0
    loop: start=0, step=1, limit=4
    $region2: #{tpu_custom_call.1} parent=1 // loop_pre_header
      _
    $region3: #{tpu_custom_call.1} parent=1 // loop_header
      %s14 = sphi 0, %s18
      %p15 = scmp.ge.s32.totalorder %s14, 4
      %s21 = sphi 0, %s33
      %s22 = sphi 0, %s29
      %s23 = sphi 0, %s21
      %s24 = sphi 0, %s22
      %s25 = sphi 0, %s23
      %s26 = sphi 0, %s24
      %s38 = sphi 0, %s40
      %s41 = sphi 0, %s38
      %s42 = sphi 0, %s41
      %s58 = sphi 0, %s42
      %s62 = sphi 0, %s62
      %s64 = sphi 0, %s62
      %s65 = sphi 0, %s64
      %s79 = sphi 0, %s65
      %s83 = sphi 0, %s83
      %s85 = sphi 0, %s83
      %s86 = sphi 0, %s85
      %s100 = sphi 0, %s86
      %s104 = sphi 0, %s104
      %s106 = sphi 0, %s104
      %s107 = sphi 0, %s106
      %s121 = sphi 0, %s107
      %s125 = sphi 0, %s125
      %s127 = sphi 0, %s125
      %s128 = sphi 0, %s127
      %s142 = sphi 0, %s128
      %s150 = sphi 0, %s152
      %s153 = sphi 0, %s150
      %s154 = sphi 0, %s153
      %s170 = sphi 0, %s154
    $region4: #{tpu_custom_call.1} parent=1 // loop_header_branch
      %17 = sbr.rel (%p15) target = $region8
    $region5: #{tpu_custom_call.1} parent=1 // loop_body
      %s19 = ssub.s32 %s14, 1
      %s20 = ssub.s32 %s14, 2
      %s27 = sadd.s32 1, %s22
      %p28 = scmp.ge.s32.totalorder %s27, 1
      %s29 = scalar_select %p28, 0, %s27
      %s30 = sadd.s32 1, %s21
      %s31 = scalar_select %p28, %s30, %s21
      %p32 = scmp.ge.s32.totalorder %s31, 2
      %s33 = scalar_select %p32, 0, %s31
      %s34 = ssub.s32 %s21, %s33
      %s35 = ssub.s32 %s22, %s29
      %s36 = sor.u32 %s34, %s35
      %p37 = scmp.eq.s32.totalorder %s36, 0
      %s39 = sadd.s32 %s38, 1
      %s40 = scalar_select %p37, %s38, %s39
      %p43 = pneg %p37
      %p44 = scmp.eq.s32.totalorder %s14, 1
      %p45 = por %p43, %p44
      %p46 = scmp.ne.s32.totalorder %s38, %s41
      %p47 = scmp.eq.s32.totalorder %s14, 0
      %p48 = por %p46, %p47
      %p49 = scmp.ne.s32.totalorder %s38, %s41
      %p50 = scmp.eq.s32.totalorder %s19, 1
      %p51 = por %p49, %p50
      %p52 = scmp.ne.s32.totalorder %s41, %s42
      %p53 = scmp.eq.s32.totalorder %s19, 0
      %p54 = por %p52, %p53
      %p55 = scmp.ne.s32.totalorder %s41, %s42
      %p56 = scmp.eq.s32.totalorder %s20, 1
      %p57 = por %p55, %p56
      %p59 = scmp.ne.s32.totalorder %s42, %s58
      %p60 = scmp.eq.s32.totalorder %s20, 0
      %p61 = por %p59, %p60
      %s63 = sadd.s32 %s62, 1
      %p66 = scmp.eq.s32.totalorder %s14, 1
      %p67 = scmp.ne.s32.totalorder %s62, %s64
      %p68 = scmp.eq.s32.totalorder %s14, 0
      %p69 = por %p67, %p68
      %p70 = scmp.ne.s32.totalorder %s62, %s64
      %p71 = scmp.eq.s32.totalorder %s19, 1
      %p72 = por %p70, %p71
      %p73 = scmp.ne.s32.totalorder %s64, %s65
      %p74 = scmp.eq.s32.totalorder %s19, 0
      %p75 = por %p73, %p74
      %p76 = scmp.ne.s32.totalorder %s64, %s65
      %p77 = scmp.eq.s32.totalorder %s20, 1
      %p78 = por %p76, %p77
      %p80 = scmp.ne.s32.totalorder %s65, %s79
      %p81 = scmp.eq.s32.totalorder %s20, 0
      %p82 = por %p80, %p81
      %s84 = sadd.s32 %s83, 1
      %p87 = scmp.eq.s32.totalorder %s14, 1
      %p88 = scmp.ne.s32.totalorder %s83, %s85
      %p89 = scmp.eq.s32.totalorder %s14, 0
      %p90 = por %p88, %p89
      %p91 = scmp.ne.s32.totalorder %s83, %s85
      %p92 = scmp.eq.s32.totalorder %s19, 1
      %p93 = por %p91, %p92
      %p94 = scmp.ne.s32.totalorder %s85, %s86
      %p95 = scmp.eq.s32.totalorder %s19, 0
      %p96 = por %p94, %p95
      %p97 = scmp.ne.s32.totalorder %s85, %s86
      %p98 = scmp.eq.s32.totalorder %s20, 1
      %p99 = por %p97, %p98
      %p101 = scmp.ne.s32.totalorder %s86, %s100
      %p102 = scmp.eq.s32.totalorder %s20, 0
      %p103 = por %p101, %p102
      %s105 = sadd.s32 %s104, 1
      %p108 = scmp.eq.s32.totalorder %s14, 1
      %p109 = scmp.ne.s32.totalorder %s104, %s106
      %p110 = scmp.eq.s32.totalorder %s14, 0
      %p111 = por %p109, %p110
      %p112 = scmp.ne.s32.totalorder %s104, %s106
      %p113 = scmp.eq.s32.totalorder %s19, 1
      %p114 = por %p112, %p113
      %p115 = scmp.ne.s32.totalorder %s106, %s107
      %p116 = scmp.eq.s32.totalorder %s19, 0
      %p117 = por %p115, %p116
      %p118 = scmp.ne.s32.totalorder %s106, %s107
      %p119 = scmp.eq.s32.totalorder %s20, 1
      %p120 = por %p118, %p119
      %p122 = scmp.ne.s32.totalorder %s107, %s121
      %p123 = scmp.eq.s32.totalorder %s20, 0
      %p124 = por %p122, %p123
      %s126 = sadd.s32 %s125, 1
      %p129 = scmp.eq.s32.totalorder %s14, 1
      %p130 = scmp.ne.s32.totalorder %s125, %s127
      %p131 = scmp.eq.s32.totalorder %s14, 0
      %p132 = por %p130, %p131
      %p133 = scmp.ne.s32.totalorder %s125, %s127
      %p134 = scmp.eq.s32.totalorder %s19, 1
      %p135 = por %p133, %p134
      %p136 = scmp.ne.s32.totalorder %s127, %s128
      %p137 = scmp.eq.s32.totalorder %s19, 0
      %p138 = por %p136, %p137
      %p139 = scmp.ne.s32.totalorder %s127, %s128
      %p140 = scmp.eq.s32.totalorder %s20, 1
      %p141 = por %p139, %p140
      %p143 = scmp.ne.s32.totalorder %s128, %s142
      %p144 = scmp.eq.s32.totalorder %s20, 0
      %p145 = por %p143, %p144
      %s146 = ssub.s32 %s21, %s33
      %s147 = ssub.s32 %s22, %s29
      %s148 = sor.u32 %s146, %s147
      %p149 = scmp.eq.s32.totalorder %s148, 0
      %s151 = sadd.s32 %s150, 1
      %s152 = scalar_select %p149, %s150, %s151
      %p155 = pneg %p149
      %p156 = scmp.eq.s32.totalorder %s14, 1
      %p157 = por %p155, %p156
      %p158 = scmp.ne.s32.totalorder %s150, %s153
      %p159 = scmp.eq.s32.totalorder %s14, 0
      %p160 = por %p158, %p159
      %p161 = scmp.ne.s32.totalorder %s150, %s153
      %p162 = scmp.eq.s32.totalorder %s19, 1
      %p163 = por %p161, %p162
      %p164 = scmp.ne.s32.totalorder %s153, %s154
      %p165 = scmp.eq.s32.totalorder %s19, 0
      %p166 = por %p164, %p165
      %p167 = scmp.ne.s32.totalorder %s153, %s154
      %p168 = scmp.eq.s32.totalorder %s20, 1
      %p169 = por %p167, %p168
      %p171 = scmp.ne.s32.totalorder %s154, %s170
      %p172 = scmp.eq.s32.totalorder %s20, 0
      %p173 = por %p171, %p172
      %p174 = scmp.le.s32.totalorder 1, %s14
      %p175 = scmp.lt.s32.totalorder %s14, 3
      %p176 = pnand %p174, %p175
      %p177 = pneg %p176
      // Predicated region
      $region9: #{tpu_custom_call.1} parent=5 // pred_check
        _
      $region10: #{tpu_custom_call.1} parent=5 // pred_check_branch
        %179 = sbr.rel (%p176) target = $region12
      $region11: #{tpu_custom_call.1} parent=5 // pred_region
        %s180 = ssub.s32 %s14, 1
        // Predicated region
        $region13: #{tpu_custom_call.1} parent=11 // pred_check
          %p181 = pneg %p75
        $region14: #{tpu_custom_call.1} parent=11 // pred_check_branch
          %183 = sbr.rel (%p181) target = $region16
        $region15: #{tpu_custom_call.1} parent=11 // pred_region
          _
        $region16: #{tpu_custom_call.1} parent=11 // pred_fallthru
          _
        // Predicated region
        $region17: #{tpu_custom_call.1} parent=11 // pred_check
          %p184 = pneg %p96
        $region18: #{tpu_custom_call.1} parent=11 // pred_check_branch
          %186 = sbr.rel (%p184) target = $region20
        $region19: #{tpu_custom_call.1} parent=11 // pred_region
          _
        $region20: #{tpu_custom_call.1} parent=11 // pred_fallthru
          _
        // Predicated region
        $region21: #{tpu_custom_call.1} parent=11 // pred_check
          %p187 = pneg %p117
        $region22: #{tpu_custom_call.1} parent=11 // pred_check_branch
          %189 = sbr.rel (%p187) target = $region24
        $region23: #{tpu_custom_call.1} parent=11 // pred_region
          _
        $region24: #{tpu_custom_call.1} parent=11 // pred_fallthru
          _
        // Predicated region
        $region25: #{tpu_custom_call.1} parent=11 // pred_check
          %p190 = pneg %p138
        $region26: #{tpu_custom_call.1} parent=11 // pred_check_branch
          %192 = sbr.rel (%p190) target = $region28
        $region27: #{tpu_custom_call.1} parent=11 // pred_region
          _
        $region28: #{tpu_custom_call.1} parent=11 // pred_fallthru
          _
      $region12: #{tpu_custom_call.1} parent=5 // pred_fallthru
        _
      %p193 = scmp.lt.s32.totalorder %s14, 2
      // Predicated region
      $region29: #{tpu_custom_call.1} parent=5 // pred_check
        %p194 = pneg %p193
      $region30: #{tpu_custom_call.1} parent=5 // pred_check_branch
        %196 = sbr.rel (%p194) target = $region32
      $region31: #{tpu_custom_call.1} parent=5 // pred_region
        // Predicated region
        $region33: #{tpu_custom_call.1} parent=31 // pred_check
          %p197 = pneg %p48
        $region34: #{tpu_custom_call.1} parent=31 // pred_check_branch
          %199 = sbr.rel (%p197) target = $region36
        $region35: #{tpu_custom_call.1} parent=31 // pred_region
          %p200 = scmp.lt.s32.totalorder %s21, 1
          %s201 = scalar_select %p200, %s21, 1
          %p202 = scmp.lt.s32.totalorder %s22, 0
          %s203 = scalar_select %p202, %s22, 0
          %s204 = sadd.s32 %s203, %s201
          %s205 = smul.addr %s204, 4
          %s206 = scalar_lea.vmem %s0, %s205
        $region36: #{tpu_custom_call.1} parent=31 // pred_fallthru
          _
      $region32: #{tpu_custom_call.1} parent=5 // pred_fallthru
        _
      %p207 = scmp.le.s32.totalorder 1, %s14
      %p208 = scmp.lt.s32.totalorder %s14, 3
      %p209 = pnand %p207, %p208
      %p210 = pneg %p209
      // Predicated region
      $region37: #{tpu_custom_call.1} parent=5 // pred_check
        _
      $region38: #{tpu_custom_call.1} parent=5 // pred_check_branch
        %212 = sbr.rel (%p209) target = $region40
      $region39: #{tpu_custom_call.1} parent=5 // pred_region
        %s213 = ssub.s32 %s14, 1
        %p214 = scmp.lt.s32.totalorder %s23, 1
        %s215 = scalar_select %p214, %s23, 1
        %p216 = scmp.lt.s32.totalorder %s24, 0
        %s217 = scalar_select %p216, %s24, 0
        %s218 = sadd.s32 %s217, %s215
        %s219 = smul.addr %s218, 4
        %s220 = scalar_lea.vmem %s0, %s219
        %p221 = pneg %p54
        %p222 = pneg %p51
        %p223 = pneg %p75
        %p224 = pneg %p72
        %p225 = pneg %p96
        %p226 = pneg %p93
        %p227 = pneg %p117
        %p228 = pneg %p114
        %p229 = pneg %p138
        %p230 = pneg %p135
        %p231 = pneg %p166
        %p232 = pneg %p163
        %s233 = sand.u32 %s153, 1
        %s234 = scalar_lea.sflag [#allocation3], %s233
        %s235 = sand.u32 %s153, 1
        %s236 = smul.addr %s235, 8
        %s237 = scalar_lea.vmem [#allocation2], %s236
        %p238 = scmp.lt.s32.totalorder %s23, 1
        %s239 = scalar_select %p238, %s23, 1
        %p240 = scmp.lt.s32.totalorder %s24, 0
        %s241 = scalar_select %p240, %s24, 0
        %s242 = sadd.s32 %s241, %s239
        %s243 = smul.addr %s242, 4
        %s244 = scalar_lea.vmem %s0, %s243
        %v245 = vld [vmem:[%s244] sm:$0xf]
        %v246 = vld [vmem:[%s1] sm:$0xff]
        %v247 = vld [vmem:[%s1 + $0x8] sm:$0xff]
        %v248 = vld [vmem:[%s1 + $0x10] sm:$0xff]
        %v249 = vld [vmem:[%s1 + $0x18] sm:$0xff]
        %v250 = vld [vmem:[%s2] sm:$0xff]
        %v251 = vld [vmem:[%s2 + $0x8] sm:$0xff]
        %v252 = vld [vmem:[%s2 + $0x10] sm:$0xff]
        %v253 = vld [vmem:[%s2 + $0x18] sm:$0xff]
        %255 = vset.pattern.permute.xlu0 0
        %256 = vperm.xlu0 %255, %v250
        %v257 = vpop.permute.xlu0 %256
        %260 = vset.pattern.permute.xlu0 0
        %261 = vperm.xlu0 %260, %v251
        %v262 = vpop.permute.xlu0 %261
        %265 = vset.pattern.permute.xlu0 0
        %266 = vperm.xlu0 %265, %v252
        %v267 = vpop.permute.xlu0 %266
        %270 = vset.pattern.permute.xlu0 0
        %271 = vperm.xlu0 %270, %v253
        %v272 = vpop.permute.xlu0 %271
        %vm274 = vcmask 31744
        %v276 = vsel %vm274, %v246, 0
        %v279 = vsel %vm274, %v247, 0
        %v282 = vsel %vm274, %v248, 0
        %v285 = vsel %vm274, %v249, 0
        %vm287 = vcmask 1043456
        %v289 = vsel %vm287, %v245, 0
        %291 = vmatprep.subr.mxu0 0.0
        %292 = vmatpush1.msra.mxu0 0.0
        %293 = vmatprep.subr.mxu0 0.0
        %294 = vmatpush1.msra.mxu0 0.0
        %295 = vmatprep.subr.mxu0 0.0
        %296 = vmatpush1.msra.mxu0 0.0
        %297 = vmatprep.subr.mxu0 0.0
        %298 = vmatpush1.msra.mxu0 0.0
        %299 = vmatprep.subr.mxu0 0.0
        %300 = vmatpush1.msra.mxu0 0.0
        %301 = vmatprep.subr.mxu0 0.0
        %302 = vmatpush1.msra.mxu0 0.0
        %303 = vmatprep.subr.mxu0 0.0
        %304 = vmatpush1.msra.mxu0 0.0
        %305 = vmatprep.subr.mxu0 0.0
        %306 = vmatpush1.msra.mxu0 0.0
        %307 = vmatprep.subr.mxu0 0.0
        %308 = vmatpush1.msra.mxu0 0.0
        %309 = vmatprep.subr.mxu0 0.0
        %310 = vmatpush1.msra.mxu0 0.0
        %311 = vmatprep.subr.mxu0 0.0
        %312 = vmatpush1.msra.mxu0 0.0
        %313 = vmatprep.subr.mxu0 0.0
        %314 = vmatpush1.msra.mxu0 0.0
        %315 = vmatprep.subr.mxu0 0.0
        %316 = vmatpush1.msra.mxu0 0.0
        %317 = vmatprep.subr.mxu0 0.0
        %318 = vmatpush1.msra.mxu0 0.0
        %319 = vmatprep.subr.mxu0 0.0
        %320 = vmatpush1.msra.mxu0 0.0
        %321 = vmatprep.subr.mxu0 0.0
        %322 = vmatpush1.msra.mxu0 %v289
        %323 = vmatprep.subr.mxu0 0.0
        %324 = vmatpush2.msra.mxu0 0.0
        %325 = vmatprep.subr.mxu0 0.0
        %326 = vmatpush2.msra.mxu0 0.0
        %327 = vmatprep.subr.mxu0 0.0
        %328 = vmatpush2.msra.mxu0 0.0
        %329 = vmatprep.subr.mxu0 0.0
        %330 = vmatpush2.msra.mxu0 0.0
        %331 = vmatprep.subr.mxu0 0.0
        %332 = vmatpush2.msra.mxu0 0.0
        %333 = vmatprep.subr.mxu0 0.0
        %334 = vmatpush2.msra.mxu0 0.0
        %335 = vmatprep.subr.mxu0 0.0
        %336 = vmatpush2.msra.mxu0 0.0
        %337 = vmatprep.subr.mxu0 0.0
        %338 = vmatpush2.msra.mxu0 0.0
        %339 = vmatprep.subr.mxu0 0.0
        %340 = vmatpush2.msra.mxu0 0.0
        %341 = vmatprep.subr.mxu0 0.0
        %342 = vmatpush2.msra.mxu0 0.0
        %343 = vmatprep.subr.mxu0 0.0
        %344 = vmatpush2.msra.mxu0 0.0
        %345 = vmatprep.subr.mxu0 0.0
        %346 = vmatpush2.msra.mxu0 0.0
        %347 = vmatprep.subr.mxu0 0.0
        %348 = vmatpush2.msra.mxu0 0.0
        %349 = vmatprep.subr.mxu0 0.0
        %350 = vmatpush2.msra.mxu0 0.0
        %351 = vmatprep.subr.mxu0 0.0
        %352 = vmatpush2.msra.mxu0 0.0
        %353 = vmatprep.subr.mxu0 0.0
        %354 = vmatpush2.msra.mxu0 0.0
        %355 = vmatprep.mubr.f32.mxu0 0.0
        %356 = vmatmul.mubr.f32.gmra.mxu0 %v276
        %v357 = vpop.f32.mrf.mxu0
        %v358 = vadd.f32 %v257, %v357
        %v359 = vpop.f32.mrf.mxu0
        %360 = vmatprep.mubr.f32.mxu0 0.0
        %361 = vmatmul.mubr.f32.gmra.mxu0 %v279
        %v362 = vpop.f32.mrf.mxu0
        %v363 = vadd.f32 %v262, %v362
        %v364 = vpop.f32.mrf.mxu0
        %365 = vmatprep.mubr.f32.mxu0 0.0
        %366 = vmatmul.mubr.f32.gmra.mxu0 %v282
        %v367 = vpop.f32.mrf.mxu0
        %v368 = vadd.f32 %v267, %v367
        %v369 = vpop.f32.mrf.mxu0
        %370 = vmatprep.mubr.f32.mxu0 0.0
        %371 = vmatmul.mubr.f32.gmra.mxu0 %v285
        %v372 = vpop.f32.mrf.mxu0
        %v373 = vadd.f32 %v272, %v372
        %v374 = vpop.f32.mrf.mxu0
        %375 = vdwg.mxu0
        %v376 = vmax.f32 %v358, 0.0
        %v377 = vmax.f32 %v363, 0.0
        %v378 = vmax.f32 %v368, 0.0
        %v379 = vmax.f32 %v373, 0.0
        %v380 = vld [vmem:[%s3] sm:$0xff]
        %v381 = vld [vmem:[%s4] sm:$0xff]
        %383 = vset.pattern.permute.xlu0 0
        %384 = vperm.xlu0 %383, %v381
        %v385 = vpop.permute.xlu0 %384
        %vm387 = vcmask 261120
        %v389 = vsel %vm387, %v380, 0
        %391 = vmatprep.subr.mxu0 0.0
        %392 = vmatpush1.msra.mxu0 0.0
        %393 = vmatprep.subr.mxu0 0.0
        %394 = vmatpush1.msra.mxu0 0.0
        %395 = vmatprep.subr.mxu0 0.0
        %396 = vmatpush1.msra.mxu0 0.0
        %397 = vmatprep.subr.mxu0 0.0
        %398 = vmatpush1.msra.mxu0 0.0
        %399 = vmatprep.subr.mxu0 0.0
        %400 = vmatpush1.msra.mxu0 0.0
        %401 = vmatprep.subr.mxu0 0.0
        %402 = vmatpush1.msra.mxu0 0.0
        %403 = vmatprep.subr.mxu0 0.0
        %404 = vmatpush1.msra.mxu0 0.0
        %405 = vmatprep.subr.mxu0 0.0
        %406 = vmatpush1.msra.mxu0 0.0
        %407 = vmatprep.subr.mxu0 0.0
        %408 = vmatpush1.msra.mxu0 0.0
        %409 = vmatprep.subr.mxu0 0.0
        %410 = vmatpush1.msra.mxu0 0.0
        %411 = vmatprep.subr.mxu0 0.0
        %412 = vmatpush1.msra.mxu0 0.0
        %413 = vmatprep.subr.mxu0 0.0
        %414 = vmatpush1.msra.mxu0 0.0
        %415 = vmatprep.subr.mxu0 0.0
        %416 = vmatpush1.msra.mxu0 %v379
        %417 = vmatprep.subr.mxu0 0.0
        %418 = vmatpush1.msra.mxu0 %v378
        %419 = vmatprep.subr.mxu0 0.0
        %420 = vmatpush1.msra.mxu0 %v377
        %421 = vmatprep.subr.mxu0 0.0
        %422 = vmatpush1.msra.mxu0 %v376
        %423 = vmatprep.subr.mxu0 0.0
        %424 = vmatpush2.msra.mxu0 0.0
        %425 = vmatprep.subr.mxu0 0.0
        %426 = vmatpush2.msra.mxu0 0.0
        %427 = vmatprep.subr.mxu0 0.0
        %428 = vmatpush2.msra.mxu0 0.0
        %429 = vmatprep.subr.mxu0 0.0
        %430 = vmatpush2.msra.mxu0 0.0
        %431 = vmatprep.subr.mxu0 0.0
        %432 = vmatpush2.msra.mxu0 0.0
        %433 = vmatprep.subr.mxu0 0.0
        %434 = vmatpush2.msra.mxu0 0.0
        %435 = vmatprep.subr.mxu0 0.0
        %436 = vmatpush2.msra.mxu0 0.0
        %437 = vmatprep.subr.mxu0 0.0
        %438 = vmatpush2.msra.mxu0 0.0
        %439 = vmatprep.subr.mxu0 0.0
        %440 = vmatpush2.msra.mxu0 0.0
        %441 = vmatprep.subr.mxu0 0.0
        %442 = vmatpush2.msra.mxu0 0.0
        %443 = vmatprep.subr.mxu0 0.0
        %444 = vmatpush2.msra.mxu0 0.0
        %445 = vmatprep.subr.mxu0 0.0
        %446 = vmatpush2.msra.mxu0 0.0
        %447 = vmatprep.subr.mxu0 0.0
        %448 = vmatpush2.msra.mxu0 0.0
        %449 = vmatprep.subr.mxu0 0.0
        %450 = vmatpush2.msra.mxu0 0.0
        %451 = vmatprep.subr.mxu0 0.0
        %452 = vmatpush2.msra.mxu0 0.0
        %453 = vmatprep.subr.mxu0 0.0
        %454 = vmatpush2.msra.mxu0 0.0
        %455 = vmatprep.mubr.f32.mxu0 0.0
        %456 = vmatmul.mubr.f32.gmra.mxu0 %v389
        %v457 = vpop.f32.mrf.mxu0
        %v458 = vadd.f32 %v385, %v457
        %v459 = vpop.f32.mrf.mxu0
        %460 = vdwg.mxu0
        %vm461 = vcmask 130048
        %462 = vst.msk [vmem:[%s237] sm:$0xff] %vm461, %v458
        %s463 = sand.u32 %s153, 1
        %s464 = scalar_lea.sflag [#allocation3], %s463
        %s465 = sand.u32 %s153, 1
        %s466 = smul.addr %s465, 8
        %s467 = scalar_lea.vmem [#allocation2], %s466
        // Predicated region
        $region41: #{tpu_custom_call.1} parent=39 // pred_check
          %p468 = pneg %p163
        $region42: #{tpu_custom_call.1} parent=39 // pred_check_branch
          %470 = sbr.rel (%p468) target = $region44
        $region43: #{tpu_custom_call.1} parent=39 // pred_region
          %s472 = ssub.s32 128, 128
          %473 = vsyncadd %s464, %s472
          %s474 = sadd.s32 %s24, %s23
          %s475 = smul.addr %s474, 128
          %s476 = scalar_lea.hbm %s5, %s475
          %s478 = sshll.u32 %s467, 4
          %s479 = int_to_ptr.vmem [resolvable:$true] %s478
          %481 = dma.vmem_to_hbm [thread:$0]  %s479, 128, %s476, %s464
        $region44: #{tpu_custom_call.1} parent=39 // pred_fallthru
          _
      $region40: #{tpu_custom_call.1} parent=5 // pred_fallthru
        _
      %p482 = scmp.le.s32.totalorder 2, %s14
      // Predicated region
      $region45: #{tpu_custom_call.1} parent=5 // pred_check
        %p483 = pneg %p482
      $region46: #{tpu_custom_call.1} parent=5 // pred_check_branch
        %485 = sbr.rel (%p483) target = $region48
      $region47: #{tpu_custom_call.1} parent=5 // pred_region
        %s486 = ssub.s32 %s14, 2
        // Predicated region
        $region49: #{tpu_custom_call.1} parent=47 // pred_check
          %p487 = pneg %p169
        $region50: #{tpu_custom_call.1} parent=47 // pred_check_branch
          %489 = sbr.rel (%p487) target = $region52
        $region51: #{tpu_custom_call.1} parent=47 // pred_region
          %s490 = sand.u32 %s154, 1
          %s491 = scalar_lea.sflag [#allocation3], %s490
          %s492 = sand.u32 %s154, 1
          %s493 = smul.addr %s492, 8
          %s494 = scalar_lea.vmem [#allocation2], %s493
          %495 = dma.done %s491, 128
        $region52: #{tpu_custom_call.1} parent=47 // pred_fallthru
          _
      $region48: #{tpu_custom_call.1} parent=5 // pred_fallthru
        _
    $region6: #{tpu_custom_call.1} parent=1 // loop_footer
      %s18 = sadd.s32 1, %s14
    $region7: #{tpu_custom_call.1} parent=1 // loop_footer_branch
      %13 = sbr.rel target = $region3
    $region8: #{tpu_custom_call.1} parent=1 // loop_exit
      _
    %496 = vsyncpa [#allocation3], 1
    %s497 = scalar_lea.sflag [#allocation3], 1
    %498 = vsyncpa %s497, 1

</llo_original>
